<compile_context>
chip_gen: v7x
topology: tpu7x:2x2x1
jax: 0.10.0
libtpu: 0.0.40
codegen_flags: <defaults>
</compile_context>

<pallas_src>
import functools

import numpy as np
import jax
import jax.numpy as jnp
from jax.experimental import pallas as pl
from jax.experimental.pallas import tpu as pltpu

_LANE = 128


def _round_up(x, m):
    return (x + m - 1) // m * m


def _sconv_fused_kernel(x_ref, w_ref, shift_ref, o_ref, mem_ref, *,
                        ks, ho, wo, tau, thresh):
    """One (batch-block, timestep) grid step: conv(+BN+pool folded) + LIF.

    x_ref:     (nb, 1, Hs, Ws, cin_k)   bf16  preprocessed input, one timestep
    w_ref:     (ks*ks*cin_k, cout_p)    bf16  weights (BN scale / pool / s2d folded)
    shift_ref: (1, cout_p)              f32   folded BN shift (conv bias included)
    o_ref:     (nb, 1, ho, wo, cout_p)  bf16  spikes out (0/1)
    mem_ref:   (nb*ho*wo, cout_p)       f32   LIF membrane, persists across t
    """
    nb = x_ref.shape[0]
    cin_k = x_ref.shape[-1]
    cout_p = w_ref.shape[-1]
    m = nb * ho * wo
    t = pl.program_id(1)

    # Reset the membrane at the start of every time sequence (T is innermost).
    @pl.when(t == 0)
    def _():
        mem_ref[...] = jnp.zeros_like(mem_ref)

    # im2col: every tap is a contiguous stride-1 window (strided convs were turned
    # into stride-1 by host-side space-to-depth).  Single MXU contraction with
    # K = ks*ks*cin_k instead of ks*ks small matmuls with K = cin.
    patches = []
    for kh in range(ks):
        for kw in range(ks):
            patches.append(
                x_ref[:, 0, kh:kh + ho, kw:kw + wo, :].reshape(m, cin_k))
    col = jnp.concatenate(patches, axis=-1) if len(patches) > 1 else patches[0]

    y = jnp.dot(col, w_ref[...], preferred_element_type=jnp.float32)
    y = y + shift_ref[...]                     # BN (scale already folded into w)

    # LIF: mem = tau*mem + y ; spike = H(mem - thresh) ; hard reset where spiked.
    mem = mem_ref[...] * tau + y
    spike = mem > thresh
    mem_ref[...] = jnp.where(spike, 0.0, mem)
    o_ref[:, 0] = spike.astype(o_ref.dtype).reshape(nb, ho, wo, cout_p)


def _prep(m, x):
    """NCHW -> NHWC, spatial zero-pad, optional space-to-depth (so the kernel conv
    is stride 1), bf16 cast.  Shared by the fused forward and the test reference."""
    b, t, cin, h, w = x.shape
    ks, st, pd = m.kernel_size, m.stride, m.padding
    ho = (h + 2 * pd - ks) // st + 1
    wo = (w + 2 * pd - ks) // st + 1
    if m.pool:
        assert ho % 2 == 0 and wo % 2 == 0, "AvgPool2d(2) path needs even conv output"
        ho, wo = ho // 2, wo // 2
    s, ks_k, cin_k = m.s, m.ks_k, m.cin_k
    hs, ws = ho + ks_k - 1, wo + ks_k - 1

    xf = jnp.transpose(x, (0, 1, 3, 4, 2))
    hp, wp = h + 2 * pd, w + 2 * pd
    hp2, wp2 = hs * s, ws * s
    xp = jnp.pad(xf, ((0, 0), (0, 0),
                      (pd, pd + max(0, hp2 - hp)),
                      (pd, pd + max(0, wp2 - wp)),
                      (0, 0)))[:, :, :hp2, :wp2, :]
    if s > 1:
        xp = xp.reshape(b, t, hs, s, ws, s, cin)
        xp = jnp.transpose(xp, (0, 1, 2, 4, 3, 5, 6)).reshape(b, t, hs, ws, cin_k)
    return xp.astype(jnp.bfloat16), (ho, wo, hs, ws)


class SConv:
    def __init__(self, in_plane, out_plane, kernel_size, stride, padding,
                 pool=False, wbit=32, tau=0.5, thresh=1.0, seed=0):
        assert wbit == 32, "TODO(synk): QConv2d (wbit<32) path not implemented"
        self.in_plane, self.out_plane = in_plane, out_plane
        self.kernel_size, self.stride, self.padding = kernel_size, stride, padding
        self.pool = pool
        self.tau, self.thresh = float(tau), float(thresh)

        # ---- deterministic synthetic parameters (PyTorch conventions) ----------
        key = jax.random.PRNGKey(seed)
        kw_, kb, kg, kbeta, km, kv = jax.random.split(key, 6)
        fan_in = in_plane * kernel_size * kernel_size
        bound = float(1.0 / np.sqrt(fan_in))
        w_oihw = jax.random.uniform(kw_, (out_plane, in_plane, kernel_size, kernel_size),
                                    jnp.float32, -bound, bound)
        self.w = jnp.transpose(w_oihw, (2, 3, 1, 0))            # HWIO f32 (reference)
        self.b = jax.random.uniform(kb, (out_plane,), jnp.float32, -bound, bound)
        gamma = jax.random.uniform(kg, (out_plane,), jnp.float32, 0.5, 1.5)
        beta = jax.random.uniform(kbeta, (out_plane,), jnp.float32, -0.5, 0.5)
        r_mean = jax.random.uniform(km, (out_plane,), jnp.float32, -0.5, 0.5)
        r_var = jax.random.uniform(kv, (out_plane,), jnp.float32, 0.5, 1.5)
        eps = 1e-5
        self.scale = gamma / jnp.sqrt(r_var + eps)               # folded BN (eval)
        self.shift = beta + self.scale * (self.b - r_mean)       # conv bias folded in

        # ---- fold AvgPool2d(2) (linear) and BN scale into the conv weights -----
        ks, st = kernel_size, stride
        if pool:
            ks_eff = ks + st
            w_eff = jnp.zeros((ks_eff, ks_eff, in_plane, out_plane), jnp.float32)
            for a in (0, 1):
                for bb in (0, 1):
                    w_eff = w_eff.at[a * st:a * st + ks, bb * st:bb * st + ks].add(0.25 * self.w)
            st_eff = 2 * st
        else:
            ks_eff, st_eff, w_eff = ks, st, self.w
        w_eff = w_eff * self.scale.reshape(1, 1, 1, out_plane)

        # ---- pad Cout to a lane-dense multiple of 128 ---------------------------
        cout_p = _round_up(out_plane, _LANE)
        self.cout_p = cout_p
        w_eff = jnp.pad(w_eff, ((0, 0), (0, 0), (0, 0), (0, cout_p - out_plane)))
        self.shift_p = jnp.pad(self.shift, (0, cout_p - out_plane)).reshape(1, cout_p)

        # ---- space-to-depth the weights so the kernel only does stride-1 taps ---
        self.s = st_eff
        if st_eff > 1:
            s = st_eff
            ks_s = -(-ks_eff // s)
            wpd = jnp.pad(w_eff, ((0, ks_s * s - ks_eff), (0, ks_s * s - ks_eff),
                                  (0, 0), (0, 0)))
            wpd = wpd.reshape(ks_s, s, ks_s, s, in_plane, cout_p)
            wpd = jnp.transpose(wpd, (0, 2, 1, 3, 4, 5)).reshape(
                ks_s, ks_s, s * s * in_plane, cout_p)
            self.ks_k, self.cin_k = ks_s, s * s * in_plane
            w_k = wpd
        else:
            self.ks_k, self.cin_k = ks_eff, in_plane
            w_k = w_eff
        self.w_col = w_k.reshape(self.ks_k * self.ks_k * self.cin_k,
                                 cout_p).astype(jnp.bfloat16)

        # ---- VMEM sizing (per-core capacity when queryable) ---------------------
        try:
            self._vmem_cap = int(pltpu.get_tpu_info().vmem_capacity_bytes)
        except Exception:
            self._vmem_cap = 64 * 2**20          # conservative (v7x per-core) fallback

        self._forward = jax.jit(self._forward_impl)

    # Largest batch-block under the VMEM budget, keeping >= 2 blocks on the
    # parallel axis so both v7x TensorCores get work.
    def _pick_nb(self, b, hs, ws, ho, wo):
        cin_k, cout_p = self.cin_k, self.cout_p
        kcol = self.ks_k * self.ks_k * cin_k
        budget = max(8 * 2**20, int(self._vmem_cap * 0.4))
        nb_max = b if b < 2 else b // 2
        best = 1
        for nb in range(1, nb_max + 1):
            if b % nb:
                continue
            x_blk = 2 * nb * hs * ws * cin_k * 2            # bf16 input, double-buffered
            o_blk = 2 * nb * ho * wo * cout_p * 2           # bf16 spikes, double-buffered
            memb = nb * ho * wo * cout_p * 4                # f32 membrane scratch
            live = nb * ho * wo * (3 * cout_p * 4 + kcol * 2)   # acc/mem/spike + im2col col
            wgt = 2 * kcol * cout_p * 2 + cout_p * 4
            if x_blk + o_blk + memb + live + wgt <= budget:
                best = nb
        return best

    def _forward_impl(self, x):
        b, t = x.shape[0], x.shape[1]
        cout, cout_p = self.out_plane, self.cout_p
        ks_k, cin_k = self.ks_k, self.cin_k

        xs, (ho_o, wo_o, hs, ws) = _prep(self, x)

        nb = self._pick_nb(b, hs, ws, ho_o, wo_o)

        est = (2 * nb * hs * ws * cin_k * 2 + 2 * nb * ho_o * wo_o * cout_p * 2
               + nb * ho_o * wo_o * cout_p * 4
               + nb * ho_o * wo_o * (3 * cout_p * 4 + ks_k * ks_k * cin_k * 2)
               + 2 * ks_k * ks_k * cin_k * cout_p * 2 + cout_p * 4)
        vmem_limit = int(min(max(2 * est, 32 * 2**20), int(self._vmem_cap * 0.8)))

        kernel = functools.partial(
            _sconv_fused_kernel, ks=ks_k, ho=ho_o, wo=wo_o,
            tau=self.tau, thresh=self.thresh)

        out = pl.pallas_call(
            kernel,
            out_shape=jax.ShapeDtypeStruct((b, t, ho_o, wo_o, cout_p), jnp.bfloat16),
            grid_spec=pltpu.PrefetchScalarGridSpec(
                num_scalar_prefetch=0,
                grid=(b // nb, t),                       # T innermost: membrane carry
                in_specs=[
                    pl.BlockSpec((nb, 1, hs, ws, cin_k), lambda i, j: (i, j, 0, 0, 0)),
                    pl.BlockSpec((ks_k * ks_k * cin_k, cout_p), lambda i, j: (0, 0)),
                    pl.BlockSpec((1, cout_p), lambda i, j: (0, 0)),
                ],
                out_specs=pl.BlockSpec((nb, 1, ho_o, wo_o, cout_p),
                                       lambda i, j: (i, j, 0, 0, 0)),
                scratch_shapes=[pltpu.VMEM((nb * ho_o * wo_o, cout_p), jnp.float32)],
            ),
            compiler_params=pltpu.CompilerParams(
                dimension_semantics=("parallel", "arbitrary"),
                vmem_limit_bytes=vmem_limit),
        )(xs, self.w_col, self.shift_p)

        # strip Cout padding, spikes back to f32, [B,T,H',W',C] -> [B,T,C,H',W'].
        out = out[..., :cout].astype(jnp.float32)
        return jnp.transpose(out, (0, 1, 4, 2, 3))

    def __call__(self, x):
        return self._forward(x)


# ----------------------- pure-JAX references for testing -----------------------
def _ref_preact(m, x):
    """Pre-activation (conv + BN (+pool), all folded) mirroring the kernel math."""
    xs, (ho, wo, hs, ws) = _prep(m, x)
    b, t = xs.shape[:2]
    ks_k, cin_k = m.ks_k, m.cin_k
    mm = b * t * ho * wo
    patches = []
    for kh in range(ks_k):
        for kw in range(ks_k):
            patches.append(xs[:, :, kh:kh + ho, kw:kw + wo, :].reshape(mm, cin_k))
    col = jnp.concatenate(patches, axis=-1) if len(patches) > 1 else patches[0]
    y = jnp.dot(col, m.w_col, preferred_element_type=jnp.float32) + m.shift_p
    return y.reshape(b, t, ho, wo, m.cout_p)


def _ref_preact_f32(m, x):
    """Straightforward unfolded f32 path: conv -> BN -> AvgPool2d(2)."""
    b, t, cin, h, w = x.shape
    ks, st, pd = m.kernel_size, m.stride, m.padding
    xf = jnp.transpose(x, (0, 1, 3, 4, 2)).reshape(b * t, h, w, cin)
    y = jax.lax.conv_general_dilated(
        xf, m.w, (st, st), [(pd, pd), (pd, pd)],
        dimension_numbers=("NHWC", "HWIO", "NHWC"))
    y = y * m.scale.reshape(1, 1, 1, -1) + m.shift.reshape(1, 1, 1, -1)
    if m.pool:
        n, ho, wo, c = y.shape
        y = y.reshape(n, ho // 2, 2, wo // 2, 2, c)
        y = 0.25 * (y[:, :, 0, :, 0] + y[:, :, 0, :, 1]
                    + y[:, :, 1, :, 0] + y[:, :, 1, :, 1])
    return y.reshape(b, t, y.shape[1], y.shape[2], y.shape[3])


def _ref_forward(m, x):
    y = _ref_preact(m, x)[..., :m.out_plane]
    b, t, ho, wo, cout = y.shape
    mem = jnp.zeros((b, ho, wo, cout), jnp.float32)
    outs = []
    for ti in range(t):
        mem = mem * m.tau + y[:, ti]
        sp = (mem > m.thresh).astype(jnp.float32)
        mem = jnp.where(sp > 0, 0.0, mem)
        outs.append(sp)
    s = jnp.stack(outs, axis=1)
    return jnp.transpose(s, (0, 1, 4, 2, 3))


if __name__ == "__main__":
    B, T, Cin, Cout, H, W = 2, 4, 4, 8, 8, 8
    KS, ST, PD = 3, 1, 1
    TAU = 0.5

    x = jax.random.normal(jax.random.PRNGKey(0), (B, T, Cin, H, W), jnp.float32)

    for pool in (False, True):
        m = SConv(Cin, Cout, KS, ST, PD, pool=pool, wbit=32, tau=TAU, seed=0)

        # Sanity check of the folding algebra: folded bf16 path vs unfolded f32 path.
        pre_mirror = np.asarray(_ref_preact(m, x)[..., :Cout])
        pre_f32 = np.asarray(_ref_preact_f32(m, x))
        np.testing.assert_allclose(pre_mirror, pre_f32, atol=5e-2, rtol=5e-2)

        # Fused Pallas kernel vs the pure-JAX mirror of the same math.
        out = jax.block_until_ready(m(x))
        ho_o = wo_o = 4 if pool else 8
        assert out.shape == (B, T, Cout, ho_o, wo_o), out.shape

        ref = _ref_forward(m, x)
        np.testing.assert_allclose(np.asarray(out), np.asarray(ref), atol=1e-5)

    print("KERNEL_OK")
</pallas_src>

<mosaic_0001>
module attributes {stable_mosaic.version = 11 : i64} {
  func.func @_sconv_fused_kernel(%arg0: i32, %arg1: i32, %arg2: memref<1x1x10x10x4xbf16, #tpu.memory_space<vmem>>, %arg3: memref<36x128xbf16, #tpu.memory_space<vmem>>, %arg4: memref<1x128xf32, #tpu.memory_space<vmem>>, %arg5: memref<1x1x8x8x128xbf16, #tpu.memory_space<vmem>>, %arg6: memref<64x128xf32, #tpu.memory_space<vmem>>) attributes {dimension_semantics = [#tpu.dimension_semantics<parallel>, #tpu.dimension_semantics<arbitrary>], iteration_bounds = array<i64: 2, 4>, scalar_prefetch = 0 : i64, scratch_operands = 1 : i64, tpu.core_type = #tpu.core_type<tc>, window_params = [{transform_indices = @transform_0, window_bounds = array<i64: 1, 1, 10, 10, 4>}, {pipeline_mode = #tpu.pipeline_mode<synchronous>, transform_indices = @transform_1, window_bounds = array<i64: 36, 128>}, {pipeline_mode = #tpu.pipeline_mode<synchronous>, transform_indices = @transform_2, window_bounds = array<i64: 1, 128>}, {transform_indices = @transform_3, window_bounds = array<i64: 1, 1, 8, 8, 128>}]} {
    %c0_i32 = arith.constant 0 : i32
    %0 = arith.cmpi eq, %arg1, %c0_i32 : i32
    %1 = arith.extui %0 : i1 to i32
    %c0_i32_0 = arith.constant 0 : i32
    %2 = arith.cmpi ne, %1, %c0_i32_0 : i32
    scf.if %2 {
      %cst_59 = arith.constant 0.000000e+00 : f32
      %52 = vector.broadcast %cst_59 : f32 to vector<64x128xf32>
      %c0_60 = arith.constant 0 : index
      %c0_61 = arith.constant 0 : index
      %53 = vector.load %arg6[%c0_60, %c0_61] : memref<64x128xf32, #tpu.memory_space<vmem>>, vector<64x128xf32>
      tpu.vector_store %arg6[%c0_60, %c0_61], %52 {strides = array<i32>} : memref<64x128xf32, #tpu.memory_space<vmem>>, vector<64x128xf32>,
    } else {
    }
    %c0 = arith.constant 0 : index
    %c0_1 = arith.constant 0 : index
    %c0_2 = arith.constant 0 : index
    %c0_3 = arith.constant 0 : index
    %c0_4 = arith.constant 0 : index
    %3 = vector.load %arg2[%c0, %c0_1, %c0_2, %c0_3, %c0_4] : memref<1x1x10x10x4xbf16, #tpu.memory_space<vmem>>, vector<1x1x8x8x4xbf16>
    %4 = vector.shape_cast %3 : vector<1x1x8x8x4xbf16> to vector<1x8x8x4xbf16>
    %5 = vector.shape_cast %4 : vector<1x8x8x4xbf16> to vector<64x4xbf16>
    %c0_5 = arith.constant 0 : index
    %c0_6 = arith.constant 0 : index
    %c0_7 = arith.constant 0 : index
    %c1 = arith.constant 1 : index
    %c0_8 = arith.constant 0 : index
    %6 = vector.load %arg2[%c0_5, %c0_6, %c0_7, %c1, %c0_8] : memref<1x1x10x10x4xbf16, #tpu.memory_space<vmem>>, vector<1x1x8x8x4xbf16>
    %7 = vector.shape_cast %6 : vector<1x1x8x8x4xbf16> to vector<1x8x8x4xbf16>
    %8 = vector.shape_cast %7 : vector<1x8x8x4xbf16> to vector<64x4xbf16>
    %c0_9 = arith.constant 0 : index
    %c0_10 = arith.constant 0 : index
    %c0_11 = arith.constant 0 : index
    %c2 = arith.constant 2 : index
    %c0_12 = arith.constant 0 : index
    %9 = vector.load %arg2[%c0_9, %c0_10, %c0_11, %c2, %c0_12] : memref<1x1x10x10x4xbf16, #tpu.memory_space<vmem>>, vector<1x1x8x8x4xbf16>
    %10 = vector.shape_cast %9 : vector<1x1x8x8x4xbf16> to vector<1x8x8x4xbf16>
    %11 = vector.shape_cast %10 : vector<1x8x8x4xbf16> to vector<64x4xbf16>
    %c0_13 = arith.constant 0 : index
    %c0_14 = arith.constant 0 : index
    %c1_15 = arith.constant 1 : index
    %c0_16 = arith.constant 0 : index
    %c0_17 = arith.constant 0 : index
    %12 = vector.load %arg2[%c0_13, %c0_14, %c1_15, %c0_16, %c0_17] : memref<1x1x10x10x4xbf16, #tpu.memory_space<vmem>>, vector<1x1x8x8x4xbf16>
    %13 = vector.shape_cast %12 : vector<1x1x8x8x4xbf16> to vector<1x8x8x4xbf16>
    %14 = vector.shape_cast %13 : vector<1x8x8x4xbf16> to vector<64x4xbf16>
    %c0_18 = arith.constant 0 : index
    %c0_19 = arith.constant 0 : index
    %c1_20 = arith.constant 1 : index
    %c1_21 = arith.constant 1 : index
    %c0_22 = arith.constant 0 : index
    %15 = vector.load %arg2[%c0_18, %c0_19, %c1_20, %c1_21, %c0_22] : memref<1x1x10x10x4xbf16, #tpu.memory_space<vmem>>, vector<1x1x8x8x4xbf16>
    %16 = vector.shape_cast %15 : vector<1x1x8x8x4xbf16> to vector<1x8x8x4xbf16>
    %17 = vector.shape_cast %16 : vector<1x8x8x4xbf16> to vector<64x4xbf16>
    %c0_23 = arith.constant 0 : index
    %c0_24 = arith.constant 0 : index
    %c1_25 = arith.constant 1 : index
    %c2_26 = arith.constant 2 : index
    %c0_27 = arith.constant 0 : index
    %18 = vector.load %arg2[%c0_23, %c0_24, %c1_25, %c2_26, %c0_27] : memref<1x1x10x10x4xbf16, #tpu.memory_space<vmem>>, vector<1x1x8x8x4xbf16>
    %19 = vector.shape_cast %18 : vector<1x1x8x8x4xbf16> to vector<1x8x8x4xbf16>
    %20 = vector.shape_cast %19 : vector<1x8x8x4xbf16> to vector<64x4xbf16>
    %c0_28 = arith.constant 0 : index
    %c0_29 = arith.constant 0 : index
    %c2_30 = arith.constant 2 : index
    %c0_31 = arith.constant 0 : index
    %c0_32 = arith.constant 0 : index
    %21 = vector.load %arg2[%c0_28, %c0_29, %c2_30, %c0_31, %c0_32] : memref<1x1x10x10x4xbf16, #tpu.memory_space<vmem>>, vector<1x1x8x8x4xbf16>
    %22 = vector.shape_cast %21 : vector<1x1x8x8x4xbf16> to vector<1x8x8x4xbf16>
    %23 = vector.shape_cast %22 : vector<1x8x8x4xbf16> to vector<64x4xbf16>
    %c0_33 = arith.constant 0 : index
    %c0_34 = arith.constant 0 : index
    %c2_35 = arith.constant 2 : index
    %c1_36 = arith.constant 1 : index
    %c0_37 = arith.constant 0 : index
    %24 = vector.load %arg2[%c0_33, %c0_34, %c2_35, %c1_36, %c0_37] : memref<1x1x10x10x4xbf16, #tpu.memory_space<vmem>>, vector<1x1x8x8x4xbf16>
    %25 = vector.shape_cast %24 : vector<1x1x8x8x4xbf16> to vector<1x8x8x4xbf16>
    %26 = vector.shape_cast %25 : vector<1x8x8x4xbf16> to vector<64x4xbf16>
    %c0_38 = arith.constant 0 : index
    %c0_39 = arith.constant 0 : index
    %c2_40 = arith.constant 2 : index
    %c2_41 = arith.constant 2 : index
    %c0_42 = arith.constant 0 : index
    %27 = vector.load %arg2[%c0_38, %c0_39, %c2_40, %c2_41, %c0_42] : memref<1x1x10x10x4xbf16, #tpu.memory_space<vmem>>, vector<1x1x8x8x4xbf16>
    %28 = vector.shape_cast %27 : vector<1x1x8x8x4xbf16> to vector<1x8x8x4xbf16>
    %29 = vector.shape_cast %28 : vector<1x8x8x4xbf16> to vector<64x4xbf16>
    %30 = tpu.concatenate %5, %8, %11, %14, %17, %20, %23, %26, %29 in 1 : vector<64x4xbf16>, vector<64x4xbf16>, vector<64x4xbf16>, vector<64x4xbf16>, vector<64x4xbf16>, vector<64x4xbf16>, vector<64x4xbf16>, vector<64x4xbf16>, vector<64x4xbf16> -> vector<64x36xbf16>
    %c0_43 = arith.constant 0 : index
    %c0_44 = arith.constant 0 : index
    %31 = vector.load %arg3[%c0_43, %c0_44] : memref<36x128xbf16, #tpu.memory_space<vmem>>, vector<36x128xbf16>
    %cst = arith.constant dense<0.000000e+00> : vector<64x128xf32>
    %32 = tpu.matmul %30, %31, %cst {dimension_numbers = #tpu.dot_dimension_numbers<[1], [0], [0], [1], [0, 0, 1, 1], [], []>} : vector<64x36xbf16>, vector<36x128xbf16>, vector<64x128xf32> -> vector<64x128xf32>
    %c0_45 = arith.constant 0 : index
    %c0_46 = arith.constant 0 : index
    %33 = vector.load %arg4[%c0_45, %c0_46] : memref<1x128xf32, #tpu.memory_space<vmem>>, vector<1x128xf32>
    %34 = vector.broadcast %33 : vector<1x128xf32> to vector<64x128xf32>
    %35 = arith.addf %32, %34 : vector<64x128xf32>
    %c0_47 = arith.constant 0 : index
    %c0_48 = arith.constant 0 : index
    %36 = vector.load %arg6[%c0_47, %c0_48] : memref<64x128xf32, #tpu.memory_space<vmem>>, vector<64x128xf32>
    %cst_49 = arith.constant 5.000000e-01 : f32
    %37 = vector.broadcast %cst_49 : f32 to vector<64x128xf32>
    %38 = arith.mulf %36, %37 : vector<64x128xf32>
    %39 = arith.addf %38, %35 : vector<64x128xf32>
    %cst_50 = arith.constant 1.000000e+00 : f32
    %40 = vector.broadcast %cst_50 : f32 to vector<64x128xf32>
    %41 = arith.cmpf ogt, %39, %40 : vector<64x128xf32>
    %cst_51 = arith.constant 0.000000e+00 : f32
    %42 = vector.broadcast %cst_51 : f32 to vector<64x128xf32>
    %43 = arith.select %41, %42, %39 : vector<64x128xi1>, vector<64x128xf32>
    %c0_52 = arith.constant 0 : index
    %c0_53 = arith.constant 0 : index
    %44 = vector.load %arg6[%c0_52, %c0_53] : memref<64x128xf32, #tpu.memory_space<vmem>>, vector<64x128xf32>
    tpu.vector_store %arg6[%c0_52, %c0_53], %43 {strides = array<i32>} : memref<64x128xf32, #tpu.memory_space<vmem>>, vector<64x128xf32>,
    %45 = arith.extui %41 : vector<64x128xi1> to vector<64x128xi32>
    %46 = arith.sitofp %45 : vector<64x128xi32> to vector<64x128xf32>
    %47 = arith.truncf %46 : vector<64x128xf32> to vector<64x128xbf16>
    %48 = vector.shape_cast %47 : vector<64x128xbf16> to vector<1x8x8x128xbf16>
    %c0_54 = arith.constant 0 : index
    %c0_55 = arith.constant 0 : index
    %c0_56 = arith.constant 0 : index
    %c0_57 = arith.constant 0 : index
    %c0_58 = arith.constant 0 : index
    %49 = vector.load %arg5[%c0_54, %c0_55, %c0_56, %c0_57, %c0_58] : memref<1x1x8x8x128xbf16, #tpu.memory_space<vmem>>, vector<1x1x8x8x128xbf16>
    %50 = vector.shape_cast %49 : vector<1x1x8x8x128xbf16> to vector<1x8x8x128xbf16>
    %51 = vector.shape_cast %48 : vector<1x8x8x128xbf16> to vector<1x1x8x8x128xbf16>
    tpu.vector_store %arg5[%c0_54, %c0_55, %c0_56, %c0_57, %c0_58], %51 {strides = array<i32>} : memref<1x1x8x8x128xbf16, #tpu.memory_space<vmem>>, vector<1x1x8x8x128xbf16>,
    return
  }
  func.func @transform_0(%arg0: i32, %arg1: i32) -> (i32, i32, i32, i32, i32) {
    %c0_i32 = arith.constant 0 : i32
    %c0_i32_0 = arith.constant 0 : i32
    %c0_i32_1 = arith.constant 0 : i32
    %c0_i32_2 = arith.constant 0 : i32
    return %arg0, %arg1, %c0_i32, %c0_i32_0, %c0_i32_1 : i32, i32, i32, i32, i32
  }
  func.func @transform_1(%arg0: i32, %arg1: i32) -> (i32, i32) {
    %c0_i32 = arith.constant 0 : i32
    %c0_i32_0 = arith.constant 0 : i32
    %c0_i32_1 = arith.constant 0 : i32
    return %c0_i32, %c0_i32_0 : i32, i32
  }
  func.func @transform_2(%arg0: i32, %arg1: i32) -> (i32, i32) {
    %c0_i32 = arith.constant 0 : i32
    %c0_i32_0 = arith.constant 0 : i32
    %c0_i32_1 = arith.constant 0 : i32
    return %c0_i32, %c0_i32_0 : i32, i32
  }
  func.func @transform_3(%arg0: i32, %arg1: i32) -> (i32, i32, i32, i32, i32) {
    %c0_i32 = arith.constant 0 : i32
    %c0_i32_0 = arith.constant 0 : i32
    %c0_i32_1 = arith.constant 0 : i32
    %c0_i32_2 = arith.constant 0 : i32
    return %arg0, %arg1, %c0_i32, %c0_i32_0, %c0_i32_1 : i32, i32, i32, i32, i32
  }
}

</mosaic_0001>

<llo_original>
// kernel: _forward_impl.1
$region0: #{_forward_impl.1}
  #allocation0 [shape = 'u32[]', space=smem, size = 0x4, offset = 0x4, fixed_abs, tag = 'smem constant byte address 0x4 - core index']
  #allocation1 [shape = 'u32[144,128]{1,0:T(1,128)}', space=vmem, size = 0x12000, scoped, tag = 'internal scratch']
  #allocation2 [shape = 'f32[64,128]{1,0:T(8,128)}', space=vmem, size = 0x8000, scoped, tag = 'scratch operand']
  %s0 = inlined_call_operand.vmem [shape: bf16[2,4,10,10,4], index: 0, kind: input, shape index: {}]
  %s1 = inlined_call_operand.vmem [shape: bf16[36,128], index: 1, kind: input, shape index: {}]
  %s2 = inlined_call_operand.vmem [shape: f32[1,128], index: 2, kind: input, shape index: {}]
  %s3 = inlined_call_operand.vmem [shape: bf16[2,4,8,8,128], index: 3, kind: output, shape index: {}]
  %s4 = sld [smem:[#allocation0]]
  $region49: #{_forward_impl.1} parent=0
    _
  %s6 = ssub.s32 1, %s4
  %s7 = scalar_select 0, %s6, %s4
  loop: start=0, step=1, limit=10
  $region2: #{_forward_impl.1} parent=0 // loop_pre_header
    _
  $region3: #{_forward_impl.1} parent=0 // loop_header
    %s9 = sphi 0, %s13
    %p10 = scmp.ge.s32.totalorder %s9, 10
    %s16 = sphi 0, %s28
    %s17 = sphi 0, %s24
    %s18 = sphi 0, %s16
    %s19 = sphi 0, %s17
    %s20 = sphi 0, %s18
    %s21 = sphi 0, %s19
    %s33 = sphi 0, %s35
    %s36 = sphi 0, %s33
    %s37 = sphi 0, %s36
    %s53 = sphi 0, %s37
    %s57 = sphi 0, %s57
    %s59 = sphi 0, %s57
    %s60 = sphi 0, %s59
    %s74 = sphi 0, %s60
    %s78 = sphi 0, %s78
    %s80 = sphi 0, %s78
    %s81 = sphi 0, %s80
    %s95 = sphi 0, %s81
    %s103 = sphi 0, %s105
    %s106 = sphi 0, %s103
    %s107 = sphi 0, %s106
    %s123 = sphi 0, %s107
  $region4: #{_forward_impl.1} parent=0 // loop_header_branch
    %12 = sbr.rel (%p10) target = $region8
  $region5: #{_forward_impl.1} parent=0 // loop_body
    %s14 = ssub.s32 %s9, 1
    %s15 = ssub.s32 %s9, 2
    %s22 = sadd.s32 1, %s17
    %p23 = scmp.ge.s32.totalorder %s22, 4
    %s24 = scalar_select %p23, 0, %s22
    %s25 = sadd.s32 1, %s16
    %s26 = scalar_select %p23, %s25, %s16
    %p27 = scmp.ge.s32.totalorder %s26, 2
    %s28 = scalar_select %p27, 0, %s26
    %s29 = ssub.s32 %s16, %s28
    %s30 = ssub.s32 %s17, %s24
    %s31 = sor.u32 %s29, %s30
    %p32 = scmp.eq.s32.totalorder %s31, 0
    %s34 = sadd.s32 %s33, 1
    %s35 = scalar_select %p32, %s33, %s34
    %p38 = pneg %p32
    %p39 = scmp.eq.s32.totalorder %s9, 7
    %p40 = por %p38, %p39
    %p41 = scmp.ne.s32.totalorder %s33, %s36
    %p42 = scmp.eq.s32.totalorder %s9, 0
    %p43 = por %p41, %p42
    %p44 = scmp.ne.s32.totalorder %s33, %s36
    %p45 = scmp.eq.s32.totalorder %s14, 7
    %p46 = por %p44, %p45
    %p47 = scmp.ne.s32.totalorder %s36, %s37
    %p48 = scmp.eq.s32.totalorder %s14, 0
    %p49 = por %p47, %p48
    %p50 = scmp.ne.s32.totalorder %s36, %s37
    %p51 = scmp.eq.s32.totalorder %s15, 7
    %p52 = por %p50, %p51
    %p54 = scmp.ne.s32.totalorder %s37, %s53
    %p55 = scmp.eq.s32.totalorder %s15, 0
    %p56 = por %p54, %p55
    %s58 = sadd.s32 %s57, 1
    %p61 = scmp.eq.s32.totalorder %s9, 7
    %p62 = scmp.ne.s32.totalorder %s57, %s59
    %p63 = scmp.eq.s32.totalorder %s9, 0
    %p64 = por %p62, %p63
    %p65 = scmp.ne.s32.totalorder %s57, %s59
    %p66 = scmp.eq.s32.totalorder %s14, 7
    %p67 = por %p65, %p66
    %p68 = scmp.ne.s32.totalorder %s59, %s60
    %p69 = scmp.eq.s32.totalorder %s14, 0
    %p70 = por %p68, %p69
    %p71 = scmp.ne.s32.totalorder %s59, %s60
    %p72 = scmp.eq.s32.totalorder %s15, 7
    %p73 = por %p71, %p72
    %p75 = scmp.ne.s32.totalorder %s60, %s74
    %p76 = scmp.eq.s32.totalorder %s15, 0
    %p77 = por %p75, %p76
    %s79 = sadd.s32 %s78, 1
    %p82 = scmp.eq.s32.totalorder %s9, 7
    %p83 = scmp.ne.s32.totalorder %s78, %s80
    %p84 = scmp.eq.s32.totalorder %s9, 0
    %p85 = por %p83, %p84
    %p86 = scmp.ne.s32.totalorder %s78, %s80
    %p87 = scmp.eq.s32.totalorder %s14, 7
    %p88 = por %p86, %p87
    %p89 = scmp.ne.s32.totalorder %s80, %s81
    %p90 = scmp.eq.s32.totalorder %s14, 0
    %p91 = por %p89, %p90
    %p92 = scmp.ne.s32.totalorder %s80, %s81
    %p93 = scmp.eq.s32.totalorder %s15, 7
    %p94 = por %p92, %p93
    %p96 = scmp.ne.s32.totalorder %s81, %s95
    %p97 = scmp.eq.s32.totalorder %s15, 0
    %p98 = por %p96, %p97
    %s99 = ssub.s32 %s16, %s28
    %s100 = ssub.s32 %s17, %s24
    %s101 = sor.u32 %s99, %s100
    %p102 = scmp.eq.s32.totalorder %s101, 0
    %s104 = sadd.s32 %s103, 1
    %s105 = scalar_select %p102, %s103, %s104
    %p108 = pneg %p102
    %p109 = scmp.eq.s32.totalorder %s9, 7
    %p110 = por %p108, %p109
    %p111 = scmp.ne.s32.totalorder %s103, %s106
    %p112 = scmp.eq.s32.totalorder %s9, 0
    %p113 = por %p111, %p112
    %p114 = scmp.ne.s32.totalorder %s103, %s106
    %p115 = scmp.eq.s32.totalorder %s14, 7
    %p116 = por %p114, %p115
    %p117 = scmp.ne.s32.totalorder %s106, %s107
    %p118 = scmp.eq.s32.totalorder %s14, 0
    %p119 = por %p117, %p118
    %p120 = scmp.ne.s32.totalorder %s106, %s107
    %p121 = scmp.eq.s32.totalorder %s15, 7
    %p122 = por %p120, %p121
    %p124 = scmp.ne.s32.totalorder %s107, %s123
    %p125 = scmp.eq.s32.totalorder %s15, 0
    %p126 = por %p124, %p125
    %p127 = scmp.le.s32.totalorder 1, %s9
    %p128 = scmp.lt.s32.totalorder %s9, 9
    %p129 = pnand %p127, %p128
    %p130 = pneg %p129
    // Predicated region
    $region9: #{_forward_impl.1} parent=5 // pred_check
      _
    $region10: #{_forward_impl.1} parent=5 // pred_check_branch
      %132 = sbr.rel (%p129) target = $region12
    $region11: #{_forward_impl.1} parent=5 // pred_region
      %s133 = ssub.s32 %s9, 1
      // Predicated region
      $region13: #{_forward_impl.1} parent=11 // pred_check
        %p134 = pneg %p70
      $region14: #{_forward_impl.1} parent=11 // pred_check_branch
        %136 = sbr.rel (%p134) target = $region16
      $region15: #{_forward_impl.1} parent=11 // pred_region
        _
      $region16: #{_forward_impl.1} parent=11 // pred_fallthru
        _
      // Predicated region
      $region17: #{_forward_impl.1} parent=11 // pred_check
        %p137 = pneg %p91
      $region18: #{_forward_impl.1} parent=11 // pred_check_branch
        %139 = sbr.rel (%p137) target = $region20
      $region19: #{_forward_impl.1} parent=11 // pred_region
        _
      $region20: #{_forward_impl.1} parent=11 // pred_fallthru
        _
    $region12: #{_forward_impl.1} parent=5 // pred_fallthru
      _
    %p140 = scmp.lt.s32.totalorder %s9, 8
    // Predicated region
    $region21: #{_forward_impl.1} parent=5 // pred_check
      %p141 = pneg %p140
    $region22: #{_forward_impl.1} parent=5 // pred_check_branch
      %143 = sbr.rel (%p141) target = $region24
    $region23: #{_forward_impl.1} parent=5 // pred_region
      // Predicated region
      $region25: #{_forward_impl.1} parent=23 // pred_check
        %p144 = pneg %p43
      $region26: #{_forward_impl.1} parent=23 // pred_check_branch
        %146 = sbr.rel (%p144) target = $region28
      $region27: #{_forward_impl.1} parent=23 // pred_region
        %p147 = scmp.lt.s32.totalorder %s16, 1
        %s148 = scalar_select %p147, %s16, 1
        %p149 = scmp.lt.s32.totalorder %s17, 3
        %s150 = scalar_select %p149, %s17, 3
        %s151 = smul.addr %s150, 20
        %s152 = smul.addr %s148, 80
        %s153 = sadd.s32 %s151, %s152
        %s154 = smul.addr %s153, 4
        %s155 = scalar_lea.vmem %s0, %s154
      $region28: #{_forward_impl.1} parent=23 // pred_fallthru
        _
    $region24: #{_forward_impl.1} parent=5 // pred_fallthru
      _
    %p156 = scmp.le.s32.totalorder 1, %s9
    %p157 = scmp.lt.s32.totalorder %s9, 9
    %p158 = pnand %p156, %p157
    %p159 = pneg %p158
    // Predicated region
    $region29: #{_forward_impl.1} parent=5 // pred_check
      _
    $region30: #{_forward_impl.1} parent=5 // pred_check_branch
      %161 = sbr.rel (%p158) target = $region32
    $region31: #{_forward_impl.1} parent=5 // pred_region
      %s162 = ssub.s32 %s9, 1
      %p163 = scmp.lt.s32.totalorder %s18, 1
      %s164 = scalar_select %p163, %s18, 1
      %p165 = scmp.lt.s32.totalorder %s19, 3
      %s166 = scalar_select %p165, %s19, 3
      %s167 = smul.addr %s166, 20
      %s168 = smul.addr %s164, 80
      %s169 = sadd.s32 %s167, %s168
      %s170 = smul.addr %s169, 4
      %s171 = scalar_lea.vmem %s0, %s170
      %p172 = pneg %p49
      %p173 = pneg %p46
      %p174 = pneg %p70
      %p175 = pneg %p67
      %p176 = pneg %p91
      %p177 = pneg %p88
      %p178 = pneg %p119
      %p179 = pneg %p116
      %p180 = scmp.lt.s32.totalorder %s18, 1
      %s181 = scalar_select %p180, %s18, 1
      %p182 = scmp.lt.s32.totalorder %s19, 3
      %s183 = scalar_select %p182, %s19, 3
      %s184 = smul.addr %s183, 8
      %s185 = smul.addr %s181, 32
      %s186 = sadd.s32 %s184, %s185
      %s187 = smul.addr %s186, 4
      %s188 = scalar_lea.vmem %s3, %s187
      %p189 = scmp.lt.s32.totalorder %s18, 1
      %s190 = scalar_select %p189, %s18, 1
      %p191 = scmp.lt.s32.totalorder %s19, 3
      %s192 = scalar_select %p191, %s19, 3
      %s193 = smul.addr %s192, 20
      %s194 = smul.addr %s190, 80
      %s195 = sadd.s32 %s193, %s194
      %s196 = smul.addr %s195, 4
      %s197 = scalar_lea.vmem %s0, %s196
      %p198 = scmp.lt.s32.totalorder %s18, 1
      %s199 = scalar_select %p198, %s18, 1
      %p200 = scmp.lt.s32.totalorder %s19, 3
      %s201 = scalar_select %p200, %s19, 3
      %s202 = smul.addr %s201, 8
      %s203 = smul.addr %s199, 32
      %s204 = sadd.s32 %s202, %s203
      %s205 = smul.addr %s204, 4
      %s206 = scalar_lea.vmem %s3, %s205
      %p208 = scmp.eq.s32.totalorder %s19, 0
      // Predicated region
      $region33: #{_forward_impl.1} parent=31 // pred_check
        %p209 = pneg %p208
      $region34: #{_forward_impl.1} parent=31 // pred_check_branch
        %211 = sbr.rel (%p209) target = $region36
      $region35: #{_forward_impl.1} parent=31 // pred_region
        %212 = vst [vmem:[#allocation2] sm:$0xff] 0.0
        %213 = vst [vmem:[#allocation2 + $0x8] sm:$0xff] 0.0
        %214 = vst [vmem:[#allocation2 + $0x10] sm:$0xff] 0.0
        %215 = vst [vmem:[#allocation2 + $0x18] sm:$0xff] 0.0
        %216 = vst [vmem:[#allocation2 + $0x20] sm:$0xff] 0.0
        %217 = vst [vmem:[#allocation2 + $0x28] sm:$0xff] 0.0
        %218 = vst [vmem:[#allocation2 + $0x30] sm:$0xff] 0.0
        %219 = vst [vmem:[#allocation2 + $0x38] sm:$0xff] 0.0
      $region36: #{_forward_impl.1} parent=31 // pred_fallthru
        _
      %v220 = vld [vmem:[%s197] sm:$0xf]
      %v221 = vld [vmem:[%s197 + $0x8] sm:$0xf]
      %v222 = vld [vmem:[%s197 + $0x10] sm:$0xf]
      %v223 = vld [vmem:[%s197 + $0x18] sm:$0xf]
      %v224 = vld [vmem:[%s197 + $0x20] sm:$0xf]
      %v225 = vld [vmem:[%s197 + $0x28] sm:$0xf]
      %v226 = vld [vmem:[%s197 + $0x30] sm:$0xf]
      %v227 = vld [vmem:[%s197 + $0x38] sm:$0xf]
      %v228 = vld [vmem:[%s197 + $0x4] sm:$0x1]
      %v229 = vld [vmem:[%s197 + $0xc] sm:$0x1]
      %v230 = vld [vmem:[%s197 + $0x14] sm:$0x1]
      %v231 = vld [vmem:[%s197 + $0x1c] sm:$0x1]
      %v232 = vld [vmem:[%s197 + $0x24] sm:$0x1]
      %v233 = vld [vmem:[%s197 + $0x2c] sm:$0x1]
      %v234 = vld [vmem:[%s197 + $0x34] sm:$0x1]
      %v235 = vld [vmem:[%s197 + $0x3c] sm:$0x1]
      %vm236 = vsmask.f32 3328
      %vm237 = vsmask.f32 7440
      %vm238 = vmor %vm236, %vm237
      %v240 = vshrl.u32 %v220, 16
      %v242 = vrot.slane %v240, 4
      %v243 = vshll.u32 %v220, 16
      %v245 = vrot.slane %v243, 5
      %v246 = vor.u32 %v242, %v245
      %v247 = vrot.slane %v246, 4
      %v249 = vshll.u32 %v228, 16
      %v251 = vrot.slane %v249, 5
      %v252 = vsel %vm238, %v247, %v251
      %v254 = vshrl.u32 %v221, 16
      %v256 = vrot.slane %v254, 4
      %v257 = vshll.u32 %v221, 16
      %v259 = vrot.slane %v257, 5
      %v260 = vor.u32 %v256, %v259
      %v261 = vrot.slane %v260, 4
      %v263 = vshll.u32 %v229, 16
      %v265 = vrot.slane %v263, 5
      %v266 = vsel %vm238, %v261, %v265
      %v268 = vshrl.u32 %v222, 16
      %v270 = vrot.slane %v268, 4
      %v271 = vshll.u32 %v222, 16
      %v273 = vrot.slane %v271, 5
      %v274 = vor.u32 %v270, %v273
      %v275 = vrot.slane %v274, 4
      %v277 = vshll.u32 %v230, 16
      %v279 = vrot.slane %v277, 5
      %v280 = vsel %vm238, %v275, %v279
      %v282 = vshrl.u32 %v223, 16
      %v284 = vrot.slane %v282, 4
      %v285 = vshll.u32 %v223, 16
      %v287 = vrot.slane %v285, 5
      %v288 = vor.u32 %v284, %v287
      %v289 = vrot.slane %v288, 4
      %v291 = vshll.u32 %v231, 16
      %v293 = vrot.slane %v291, 5
      %v294 = vsel %vm238, %v289, %v293
      %v296 = vshrl.u32 %v224, 16
      %v298 = vrot.slane %v296, 4
      %v299 = vshll.u32 %v224, 16
      %v301 = vrot.slane %v299, 5
      %v302 = vor.u32 %v298, %v301
      %v303 = vrot.slane %v302, 4
      %v305 = vshll.u32 %v232, 16
      %v307 = vrot.slane %v305, 5
      %v308 = vsel %vm238, %v303, %v307
      %v310 = vshrl.u32 %v225, 16
      %v312 = vrot.slane %v310, 4
      %v313 = vshll.u32 %v225, 16
      %v315 = vrot.slane %v313, 5
      %v316 = vor.u32 %v312, %v315
      %v317 = vrot.slane %v316, 4
      %v319 = vshll.u32 %v233, 16
      %v321 = vrot.slane %v319, 5
      %v322 = vsel %vm238, %v317, %v321
      %v324 = vshrl.u32 %v226, 16
      %v326 = vrot.slane %v324, 4
      %v327 = vshll.u32 %v226, 16
      %v329 = vrot.slane %v327, 5
      %v330 = vor.u32 %v326, %v329
      %v331 = vrot.slane %v330, 4
      %v333 = vshll.u32 %v234, 16
      %v335 = vrot.slane %v333, 5
      %v336 = vsel %vm238, %v331, %v335
      %v338 = vshrl.u32 %v227, 16
      %v340 = vrot.slane %v338, 4
      %v341 = vshll.u32 %v227, 16
      %v343 = vrot.slane %v341, 5
      %v344 = vor.u32 %v340, %v343
      %v345 = vrot.slane %v344, 4
      %v347 = vshll.u32 %v235, 16
      %v349 = vrot.slane %v347, 5
      %v350 = vsel %vm238, %v345, %v349
      %v351 = vld [vmem:[%s197] sm:$0xe]
      %v352 = vld [vmem:[%s197 + $0x8] sm:$0xe]
      %v353 = vld [vmem:[%s197 + $0x10] sm:$0xe]
      %v354 = vld [vmem:[%s197 + $0x18] sm:$0xe]
      %v355 = vld [vmem:[%s197 + $0x20] sm:$0xe]
      %v356 = vld [vmem:[%s197 + $0x28] sm:$0xe]
      %v357 = vld [vmem:[%s197 + $0x30] sm:$0xe]
      %v358 = vld [vmem:[%s197 + $0x38] sm:$0xe]
      %vm375 = vcmask 1042432
      %vm376 = vcmask 1046532
      %vm377 = vmor %vm375, %vm376
      %v378 = vrot.slane %v351, 5
      %v379 = vrot.slane %v378, 4
      %v380 = vrot.slane %v228, 5
      %v381 = vsel %vm377, %v379, %v380
      %v382 = vrot.slane %v352, 5
      %v383 = vrot.slane %v382, 4
      %v384 = vrot.slane %v229, 5
      %v385 = vsel %vm377, %v383, %v384
      %v386 = vrot.slane %v353, 5
      %v387 = vrot.slane %v386, 4
      %v388 = vrot.slane %v230, 5
      %v389 = vsel %vm377, %v387, %v388
      %v390 = vrot.slane %v354, 5
      %v391 = vrot.slane %v390, 4
      %v392 = vrot.slane %v231, 5
      %v393 = vsel %vm377, %v391, %v392
      %v394 = vrot.slane %v355, 5
      %v395 = vrot.slane %v394, 4
      %v396 = vrot.slane %v232, 5
      %v397 = vsel %vm377, %v395, %v396
      %v398 = vrot.slane %v356, 5
      %v399 = vrot.slane %v398, 4
      %v400 = vrot.slane %v233, 5
      %v401 = vsel %vm377, %v399, %v400
      %v402 = vrot.slane %v357, 5
      %v403 = vrot.slane %v402, 4
      %v404 = vrot.slane %v234, 5
      %v405 = vsel %vm377, %v403, %v404
      %v406 = vrot.slane %v358, 5
      %v407 = vrot.slane %v406, 4
      %v408 = vrot.slane %v235, 5
      %v409 = vsel %vm377, %v407, %v408
      %s410 = scalar_lea.vmem %s197, 8
      %v411 = vld [vmem:[%s410] sm:$0xf]
      %v412 = vld [vmem:[%s410 + $0x8] sm:$0xf]
      %v413 = vld [vmem:[%s410 + $0x10] sm:$0xf]
      %v414 = vld [vmem:[%s410 + $0x18] sm:$0xf]
      %v415 = vld [vmem:[%s410 + $0x20] sm:$0xf]
      %v416 = vld [vmem:[%s410 + $0x28] sm:$0xf]
      %v417 = vld [vmem:[%s410 + $0x30] sm:$0xf]
      %v418 = vld [vmem:[%s410 + $0x38] sm:$0xf]
      %v419 = vld [vmem:[%s410 + $0x4] sm:$0x1]
      %v420 = vld [vmem:[%s410 + $0xc] sm:$0x1]
      %v421 = vld [vmem:[%s410 + $0x14] sm:$0x1]
      %v422 = vld [vmem:[%s410 + $0x1c] sm:$0x1]
      %v423 = vld [vmem:[%s410 + $0x24] sm:$0x1]
      %v424 = vld [vmem:[%s410 + $0x2c] sm:$0x1]
      %v425 = vld [vmem:[%s410 + $0x34] sm:$0x1]
      %v426 = vld [vmem:[%s410 + $0x3c] sm:$0x1]
      %v428 = vshrl.u32 %v411, 16
      %v430 = vrot.slane %v428, 4
      %v431 = vshll.u32 %v411, 16
      %v433 = vrot.slane %v431, 5
      %v434 = vor.u32 %v430, %v433
      %v435 = vrot.slane %v434, 4
      %v437 = vshll.u32 %v419, 16
      %v439 = vrot.slane %v437, 5
      %v440 = vsel %vm238, %v435, %v439
      %v442 = vshrl.u32 %v412, 16
      %v444 = vrot.slane %v442, 4
      %v445 = vshll.u32 %v412, 16
      %v447 = vrot.slane %v445, 5
      %v448 = vor.u32 %v444, %v447
      %v449 = vrot.slane %v448, 4
      %v451 = vshll.u32 %v420, 16
      %v453 = vrot.slane %v451, 5
      %v454 = vsel %vm238, %v449, %v453
      %v456 = vshrl.u32 %v413, 16
      %v458 = vrot.slane %v456, 4
      %v459 = vshll.u32 %v413, 16
      %v461 = vrot.slane %v459, 5
      %v462 = vor.u32 %v458, %v461
      %v463 = vrot.slane %v462, 4
      %v465 = vshll.u32 %v421, 16
      %v467 = vrot.slane %v465, 5
      %v468 = vsel %vm238, %v463, %v467
      %v470 = vshrl.u32 %v414, 16
      %v472 = vrot.slane %v470, 4
      %v473 = vshll.u32 %v414, 16
      %v475 = vrot.slane %v473, 5
      %v476 = vor.u32 %v472, %v475
      %v477 = vrot.slane %v476, 4
      %v479 = vshll.u32 %v422, 16
      %v481 = vrot.slane %v479, 5
      %v482 = vsel %vm238, %v477, %v481
      %v484 = vshrl.u32 %v415, 16
      %v486 = vrot.slane %v484, 4
      %v487 = vshll.u32 %v415, 16
      %v489 = vrot.slane %v487, 5
      %v490 = vor.u32 %v486, %v489
      %v491 = vrot.slane %v490, 4
      %v493 = vshll.u32 %v423, 16
      %v495 = vrot.slane %v493, 5
      %v496 = vsel %vm238, %v491, %v495
      %v498 = vshrl.u32 %v416, 16
      %v500 = vrot.slane %v498, 4
      %v501 = vshll.u32 %v416, 16
      %v503 = vrot.slane %v501, 5
      %v504 = vor.u32 %v500, %v503
      %v505 = vrot.slane %v504, 4
      %v507 = vshll.u32 %v424, 16
      %v509 = vrot.slane %v507, 5
      %v510 = vsel %vm238, %v505, %v509
      %v512 = vshrl.u32 %v417, 16
      %v514 = vrot.slane %v512, 4
      %v515 = vshll.u32 %v417, 16
      %v517 = vrot.slane %v515, 5
      %v518 = vor.u32 %v514, %v517
      %v519 = vrot.slane %v518, 4
      %v521 = vshll.u32 %v425, 16
      %v523 = vrot.slane %v521, 5
      %v524 = vsel %vm238, %v519, %v523
      %v526 = vshrl.u32 %v418, 16
      %v528 = vrot.slane %v526, 4
      %v529 = vshll.u32 %v418, 16
      %v531 = vrot.slane %v529, 5
      %v532 = vor.u32 %v528, %v531
      %v533 = vrot.slane %v532, 4
      %v535 = vshll.u32 %v426, 16
      %v537 = vrot.slane %v535, 5
      %v538 = vsel %vm238, %v533, %v537
      %v539 = vld [vmem:[%s410] sm:$0xe]
      %v540 = vld [vmem:[%s410 + $0x8] sm:$0xe]
      %v541 = vld [vmem:[%s410 + $0x10] sm:$0xe]
      %v542 = vld [vmem:[%s410 + $0x18] sm:$0xe]
      %v543 = vld [vmem:[%s410 + $0x20] sm:$0xe]
      %v544 = vld [vmem:[%s410 + $0x28] sm:$0xe]
      %v545 = vld [vmem:[%s410 + $0x30] sm:$0xe]
      %v546 = vld [vmem:[%s410 + $0x38] sm:$0xe]
      %v563 = vrot.slane %v539, 5
      %v564 = vrot.slane %v563, 4
      %v565 = vrot.slane %v419, 5
      %v566 = vsel %vm377, %v564, %v565
      %v567 = vrot.slane %v540, 5
      %v568 = vrot.slane %v567, 4
      %v569 = vrot.slane %v420, 5
      %v570 = vsel %vm377, %v568, %v569
      %v571 = vrot.slane %v541, 5
      %v572 = vrot.slane %v571, 4
      %v573 = vrot.slane %v421, 5
      %v574 = vsel %vm377, %v572, %v573
      %v575 = vrot.slane %v542, 5
      %v576 = vrot.slane %v575, 4
      %v577 = vrot.slane %v422, 5
      %v578 = vsel %vm377, %v576, %v577
      %v579 = vrot.slane %v543, 5
      %v580 = vrot.slane %v579, 4
      %v581 = vrot.slane %v423, 5
      %v582 = vsel %vm377, %v580, %v581
      %v583 = vrot.slane %v544, 5
      %v584 = vrot.slane %v583, 4
      %v585 = vrot.slane %v424, 5
      %v586 = vsel %vm377, %v584, %v585
      %v587 = vrot.slane %v545, 5
      %v588 = vrot.slane %v587, 4
      %v589 = vrot.slane %v425, 5
      %v590 = vsel %vm377, %v588, %v589
      %v591 = vrot.slane %v546, 5
      %v592 = vrot.slane %v591, 4
      %v593 = vrot.slane %v426, 5
      %v594 = vsel %vm377, %v592, %v593
      %s595 = scalar_lea.vmem %s197, 16
      %v596 = vld [vmem:[%s595] sm:$0xf]
      %v597 = vld [vmem:[%s595 + $0x8] sm:$0xf]
      %v598 = vld [vmem:[%s595 + $0x10] sm:$0xf]
      %v599 = vld [vmem:[%s595 + $0x18] sm:$0xf]
      %v600 = vld [vmem:[%s595 + $0x20] sm:$0xf]
      %v601 = vld [vmem:[%s595 + $0x28] sm:$0xf]
      %v602 = vld [vmem:[%s595 + $0x30] sm:$0xf]
      %v603 = vld [vmem:[%s595 + $0x38] sm:$0xf]
      %v604 = vld [vmem:[%s595 + $0x4] sm:$0x1]
      %v605 = vld [vmem:[%s595 + $0xc] sm:$0x1]
      %v606 = vld [vmem:[%s595 + $0x14] sm:$0x1]
      %v607 = vld [vmem:[%s595 + $0x1c] sm:$0x1]
      %v608 = vld [vmem:[%s595 + $0x24] sm:$0x1]
      %v609 = vld [vmem:[%s595 + $0x2c] sm:$0x1]
      %v610 = vld [vmem:[%s595 + $0x34] sm:$0x1]
      %v611 = vld [vmem:[%s595 + $0x3c] sm:$0x1]
      %v613 = vshrl.u32 %v596, 16
      %v615 = vrot.slane %v613, 4
      %v616 = vshll.u32 %v596, 16
      %v618 = vrot.slane %v616, 5
      %v619 = vor.u32 %v615, %v618
      %v620 = vrot.slane %v619, 4
      %v622 = vshll.u32 %v604, 16
      %v624 = vrot.slane %v622, 5
      %v625 = vsel %vm238, %v620, %v624
      %v627 = vshrl.u32 %v597, 16
      %v629 = vrot.slane %v627, 4
      %v630 = vshll.u32 %v597, 16
      %v632 = vrot.slane %v630, 5
      %v633 = vor.u32 %v629, %v632
      %v634 = vrot.slane %v633, 4
      %v636 = vshll.u32 %v605, 16
      %v638 = vrot.slane %v636, 5
      %v639 = vsel %vm238, %v634, %v638
      %v641 = vshrl.u32 %v598, 16
      %v643 = vrot.slane %v641, 4
      %v644 = vshll.u32 %v598, 16
      %v646 = vrot.slane %v644, 5
      %v647 = vor.u32 %v643, %v646
      %v648 = vrot.slane %v647, 4
      %v650 = vshll.u32 %v606, 16
      %v652 = vrot.slane %v650, 5
      %v653 = vsel %vm238, %v648, %v652
      %v655 = vshrl.u32 %v599, 16
      %v657 = vrot.slane %v655, 4
      %v658 = vshll.u32 %v599, 16
      %v660 = vrot.slane %v658, 5
      %v661 = vor.u32 %v657, %v660
      %v662 = vrot.slane %v661, 4
      %v664 = vshll.u32 %v607, 16
      %v666 = vrot.slane %v664, 5
      %v667 = vsel %vm238, %v662, %v666
      %v669 = vshrl.u32 %v600, 16
      %v671 = vrot.slane %v669, 4
      %v672 = vshll.u32 %v600, 16
      %v674 = vrot.slane %v672, 5
      %v675 = vor.u32 %v671, %v674
      %v676 = vrot.slane %v675, 4
      %v678 = vshll.u32 %v608, 16
      %v680 = vrot.slane %v678, 5
      %v681 = vsel %vm238, %v676, %v680
      %v683 = vshrl.u32 %v601, 16
      %v685 = vrot.slane %v683, 4
      %v686 = vshll.u32 %v601, 16
      %v688 = vrot.slane %v686, 5
      %v689 = vor.u32 %v685, %v688
      %v690 = vrot.slane %v689, 4
      %v692 = vshll.u32 %v609, 16
      %v694 = vrot.slane %v692, 5
      %v695 = vsel %vm238, %v690, %v694
      %v697 = vshrl.u32 %v602, 16
      %v699 = vrot.slane %v697, 4
      %v700 = vshll.u32 %v602, 16
      %v702 = vrot.slane %v700, 5
      %v703 = vor.u32 %v699, %v702
      %v704 = vrot.slane %v703, 4
      %v706 = vshll.u32 %v610, 16
      %v708 = vrot.slane %v706, 5
      %v709 = vsel %vm238, %v704, %v708
      %v711 = vshrl.u32 %v603, 16
      %v713 = vrot.slane %v711, 4
      %v714 = vshll.u32 %v603, 16
      %v716 = vrot.slane %v714, 5
      %v717 = vor.u32 %v713, %v716
      %v718 = vrot.slane %v717, 4
      %v720 = vshll.u32 %v611, 16
      %v722 = vrot.slane %v720, 5
      %v723 = vsel %vm238, %v718, %v722
      %v724 = vld [vmem:[%s595] sm:$0xe]
      %v725 = vld [vmem:[%s595 + $0x8] sm:$0xe]
      %v726 = vld [vmem:[%s595 + $0x10] sm:$0xe]
      %v727 = vld [vmem:[%s595 + $0x18] sm:$0xe]
      %v728 = vld [vmem:[%s595 + $0x20] sm:$0xe]
      %v729 = vld [vmem:[%s595 + $0x28] sm:$0xe]
      %v730 = vld [vmem:[%s595 + $0x30] sm:$0xe]
      %v731 = vld [vmem:[%s595 + $0x38] sm:$0xe]
      %v748 = vrot.slane %v724, 5
      %v749 = vrot.slane %v748, 4
      %v750 = vrot.slane %v604, 5
      %v751 = vsel %vm377, %v749, %v750
      %v752 = vrot.slane %v725, 5
      %v753 = vrot.slane %v752, 4
      %v754 = vrot.slane %v605, 5
      %v755 = vsel %vm377, %v753, %v754
      %v756 = vrot.slane %v726, 5
      %v757 = vrot.slane %v756, 4
      %v758 = vrot.slane %v606, 5
      %v759 = vsel %vm377, %v757, %v758
      %v760 = vrot.slane %v727, 5
      %v761 = vrot.slane %v760, 4
      %v762 = vrot.slane %v607, 5
      %v763 = vsel %vm377, %v761, %v762
      %v764 = vrot.slane %v728, 5
      %v765 = vrot.slane %v764, 4
      %v766 = vrot.slane %v608, 5
      %v767 = vsel %vm377, %v765, %v766
      %v768 = vrot.slane %v729, 5
      %v769 = vrot.slane %v768, 4
      %v770 = vrot.slane %v609, 5
      %v771 = vsel %vm377, %v769, %v770
      %v772 = vrot.slane %v730, 5
      %v773 = vrot.slane %v772, 4
      %v774 = vrot.slane %v610, 5
      %v775 = vsel %vm377, %v773, %v774
      %v776 = vrot.slane %v731, 5
      %v777 = vrot.slane %v776, 4
      %v778 = vrot.slane %v611, 5
      %v779 = vsel %vm377, %v777, %v778
      %v788 = vunpack.c.l.b16 %v220
      %v789 = vunpack.c.l.b16 %v221
      %v790 = vunpack.c.l.b16 %v222
      %v791 = vunpack.c.l.b16 %v223
      %v792 = vunpack.c.l.b16 %v224
      %v793 = vunpack.c.l.b16 %v225
      %v794 = vunpack.c.l.b16 %v226
      %v795 = vunpack.c.l.b16 %v227
      %v796 = vpack.c.b16 %v789, %v788
      %v797 = vpack.c.b16 %v791, %v790
      %v798 = vpack.c.b16 %v793, %v792
      %v799 = vpack.c.b16 %v795, %v794
      %v800 = vunpack.c.l.b16 %v252
      %v801 = vunpack.c.l.b16 %v266
      %v802 = vunpack.c.l.b16 %v280
      %v803 = vunpack.c.l.b16 %v294
      %v804 = vunpack.c.l.b16 %v308
      %v805 = vunpack.c.l.b16 %v322
      %v806 = vunpack.c.l.b16 %v336
      %v807 = vunpack.c.l.b16 %v350
      %v808 = vpack.c.b16 %v801, %v800
      %v809 = vpack.c.b16 %v803, %v802
      %v810 = vpack.c.b16 %v805, %v804
      %v811 = vpack.c.b16 %v807, %v806
      %812 = vrot.lane.b32.xlu0 %v808, 4
      %v813 = vpop.permute.xlu0 %812
      %814 = vrot.lane.b32.xlu0 %v809, 4
      %v815 = vpop.permute.xlu0 %814
      %816 = vrot.lane.b32.xlu0 %v810, 4
      %v817 = vpop.permute.xlu0 %816
      %818 = vrot.lane.b32.xlu0 %v811, 4
      %v819 = vpop.permute.xlu0 %818
      %v820 = vunpack.c.l.b16 %v381
      %v821 = vunpack.c.l.b16 %v385
      %v822 = vunpack.c.l.b16 %v389
      %v823 = vunpack.c.l.b16 %v393
      %v824 = vunpack.c.l.b16 %v397
      %v825 = vunpack.c.l.b16 %v401
      %v826 = vunpack.c.l.b16 %v405
      %v827 = vunpack.c.l.b16 %v409
      %v828 = vpack.c.b16 %v821, %v820
      %v829 = vpack.c.b16 %v823, %v822
      %v830 = vpack.c.b16 %v825, %v824
      %v831 = vpack.c.b16 %v827, %v826
      %832 = vrot.lane.b32.xlu0 %v828, 8
      %v833 = vpop.permute.xlu0 %832
      %834 = vrot.lane.b32.xlu0 %v829, 8
      %v835 = vpop.permute.xlu0 %834
      %836 = vrot.lane.b32.xlu0 %v830, 8
      %v837 = vpop.permute.xlu0 %836
      %838 = vrot.lane.b32.xlu0 %v831, 8
      %v839 = vpop.permute.xlu0 %838
      %v848 = vunpack.c.l.b16 %v411
      %v849 = vunpack.c.l.b16 %v412
      %v850 = vunpack.c.l.b16 %v413
      %v851 = vunpack.c.l.b16 %v414
      %v852 = vunpack.c.l.b16 %v415
      %v853 = vunpack.c.l.b16 %v416
      %v854 = vunpack.c.l.b16 %v417
      %v855 = vunpack.c.l.b16 %v418
      %v856 = vpack.c.b16 %v849, %v848
      %v857 = vpack.c.b16 %v851, %v850
      %v858 = vpack.c.b16 %v853, %v852
      %v859 = vpack.c.b16 %v855, %v854
      %860 = vrot.lane.b32.xlu0 %v856, 12
      %v861 = vpop.permute.xlu0 %860
      %862 = vrot.lane.b32.xlu0 %v857, 12
      %v863 = vpop.permute.xlu0 %862
      %864 = vrot.lane.b32.xlu0 %v858, 12
      %v865 = vpop.permute.xlu0 %864
      %866 = vrot.lane.b32.xlu0 %v859, 12
      %v867 = vpop.permute.xlu0 %866
      %v868 = vunpack.c.l.b16 %v440
      %v869 = vunpack.c.l.b16 %v454
      %v870 = vunpack.c.l.b16 %v468
      %v871 = vunpack.c.l.b16 %v482
      %v872 = vunpack.c.l.b16 %v496
      %v873 = vunpack.c.l.b16 %v510
      %v874 = vunpack.c.l.b16 %v524
      %v875 = vunpack.c.l.b16 %v538
      %v876 = vpack.c.b16 %v869, %v868
      %v877 = vpack.c.b16 %v871, %v870
      %v878 = vpack.c.b16 %v873, %v872
      %v879 = vpack.c.b16 %v875, %v874
      %880 = vrot.lane.b32.xlu0 %v876, 16
      %v881 = vpop.permute.xlu0 %880
      %882 = vrot.lane.b32.xlu0 %v877, 16
      %v883 = vpop.permute.xlu0 %882
      %884 = vrot.lane.b32.xlu0 %v878, 16
      %v885 = vpop.permute.xlu0 %884
      %886 = vrot.lane.b32.xlu0 %v879, 16
      %v887 = vpop.permute.xlu0 %886
      %v888 = vunpack.c.l.b16 %v566
      %v889 = vunpack.c.l.b16 %v570
      %v890 = vunpack.c.l.b16 %v574
      %v891 = vunpack.c.l.b16 %v578
      %v892 = vunpack.c.l.b16 %v582
      %v893 = vunpack.c.l.b16 %v586
      %v894 = vunpack.c.l.b16 %v590
      %v895 = vunpack.c.l.b16 %v594
      %v896 = vpack.c.b16 %v889, %v888
      %v897 = vpack.c.b16 %v891, %v890
      %v898 = vpack.c.b16 %v893, %v892
      %v899 = vpack.c.b16 %v895, %v894
      %900 = vrot.lane.b32.xlu0 %v896, 20
      %v901 = vpop.permute.xlu0 %900
      %902 = vrot.lane.b32.xlu0 %v897, 20
      %v903 = vpop.permute.xlu0 %902
      %904 = vrot.lane.b32.xlu0 %v898, 20
      %v905 = vpop.permute.xlu0 %904
      %906 = vrot.lane.b32.xlu0 %v899, 20
      %v907 = vpop.permute.xlu0 %906
      %v916 = vunpack.c.l.b16 %v596
      %v917 = vunpack.c.l.b16 %v597
      %v918 = vunpack.c.l.b16 %v598
      %v919 = vunpack.c.l.b16 %v599
      %v920 = vunpack.c.l.b16 %v600
      %v921 = vunpack.c.l.b16 %v601
      %v922 = vunpack.c.l.b16 %v602
      %v923 = vunpack.c.l.b16 %v603
      %v924 = vpack.c.b16 %v917, %v916
      %v925 = vpack.c.b16 %v919, %v918
      %v926 = vpack.c.b16 %v921, %v920
      %v927 = vpack.c.b16 %v923, %v922
      %928 = vrot.lane.b32.xlu0 %v924, 24
      %v929 = vpop.permute.xlu0 %928
      %930 = vrot.lane.b32.xlu0 %v925, 24
      %v931 = vpop.permute.xlu0 %930
      %932 = vrot.lane.b32.xlu0 %v926, 24
      %v933 = vpop.permute.xlu0 %932
      %934 = vrot.lane.b32.xlu0 %v927, 24
      %v935 = vpop.permute.xlu0 %934
      %v936 = vunpack.c.l.b16 %v625
      %v937 = vunpack.c.l.b16 %v639
      %v938 = vunpack.c.l.b16 %v653
      %v939 = vunpack.c.l.b16 %v667
      %v940 = vunpack.c.l.b16 %v681
      %v941 = vunpack.c.l.b16 %v695
      %v942 = vunpack.c.l.b16 %v709
      %v943 = vunpack.c.l.b16 %v723
      %v944 = vpack.c.b16 %v937, %v936
      %v945 = vpack.c.b16 %v939, %v938
      %v946 = vpack.c.b16 %v941, %v940
      %v947 = vpack.c.b16 %v943, %v942
      %948 = vrot.lane.b32.xlu0 %v944, 28
      %v949 = vpop.permute.xlu0 %948
      %950 = vrot.lane.b32.xlu0 %v945, 28
      %v951 = vpop.permute.xlu0 %950
      %952 = vrot.lane.b32.xlu0 %v946, 28
      %v953 = vpop.permute.xlu0 %952
      %954 = vrot.lane.b32.xlu0 %v947, 28
      %v955 = vpop.permute.xlu0 %954
      %v956 = vunpack.c.l.b16 %v751
      %v957 = vunpack.c.l.b16 %v755
      %v958 = vunpack.c.l.b16 %v759
      %v959 = vunpack.c.l.b16 %v763
      %v960 = vunpack.c.l.b16 %v767
      %v961 = vunpack.c.l.b16 %v771
      %v962 = vunpack.c.l.b16 %v775
      %v963 = vunpack.c.l.b16 %v779
      %v964 = vpack.c.b16 %v957, %v956
      %v965 = vpack.c.b16 %v959, %v958
      %v966 = vpack.c.b16 %v961, %v960
      %v967 = vpack.c.b16 %v963, %v962
      %968 = vrot.lane.b32.xlu0 %v964, 32
      %v969 = vpop.permute.xlu0 %968
      %970 = vrot.lane.b32.xlu0 %v965, 32
      %v971 = vpop.permute.xlu0 %970
      %972 = vrot.lane.b32.xlu0 %v966, 32
      %v973 = vpop.permute.xlu0 %972
      %974 = vrot.lane.b32.xlu0 %v967, 32
      %v975 = vpop.permute.xlu0 %974
      %vm976 = vcmask 31744
      %v979 = vsel %vm976, %v796, %v813
      %v982 = vsel %vm976, %v797, %v815
      %v985 = vsel %vm976, %v798, %v817
      %v988 = vsel %vm976, %v799, %v819
      %vm989 = vcmask 64512
      %v991 = vsel %vm989, %v979, %v833
      %v993 = vsel %vm989, %v982, %v835
      %v995 = vsel %vm989, %v985, %v837
      %v997 = vsel %vm989, %v988, %v839
      %vm998 = vcmask 97280
      %v1000 = vsel %vm998, %v991, %v861
      %v1002 = vsel %vm998, %v993, %v863
      %v1004 = vsel %vm998, %v995, %v865
      %v1006 = vsel %vm998, %v997, %v867
      %vm1007 = vcmask 130048
      %v1009 = vsel %vm1007, %v1000, %v881
      %v1011 = vsel %vm1007, %v1002, %v883
      %v1013 = vsel %vm1007, %v1004, %v885
      %v1015 = vsel %vm1007, %v1006, %v887
      %vm1016 = vcmask 162816
      %v1018 = vsel %vm1016, %v1009, %v901
      %v1020 = vsel %vm1016, %v1011, %v903
      %v1022 = vsel %vm1016, %v1013, %v905
      %v1024 = vsel %vm1016, %v1015, %v907
      %vm1025 = vcmask 195584
      %v1027 = vsel %vm1025, %v1018, %v929
      %v1029 = vsel %vm1025, %v1020, %v931
      %v1031 = vsel %vm1025, %v1022, %v933
      %v1033 = vsel %vm1025, %v1024, %v935
      %vm1034 = vcmask 228352
      %v1036 = vsel %vm1034, %v1027, %v949
      %v1038 = vsel %vm1034, %v1029, %v951
      %v1040 = vsel %vm1034, %v1031, %v953
      %v1042 = vsel %vm1034, %v1033, %v955
      %vm1043 = vcmask 261120
      %v1045 = vsel %vm1043, %v1036, %v969
      %v1047 = vsel %vm1043, %v1038, %v971
      %v1049 = vsel %vm1043, %v1040, %v973
      %v1051 = vsel %vm1043, %v1042, %v975
      %v1052 = vld [vmem:[%s1] sm:$0xf]
      %v1053 = vld [vmem:[%s1 + $0x4] sm:$0xf]
      %v1054 = vld [vmem:[%s1 + $0x8] sm:$0xf]
      %v1055 = vld [vmem:[%s1 + $0xc] sm:$0xf]
      %v1056 = vld [vmem:[%s1 + $0x10] sm:$0x3]
      %v1057 = vld [vmem:[%s2] sm:$0x1]
      %v1059 = vlaneseq
      %v1060 = vshrl.u32 %v1059, 7
      %v1061 = vsub.s32 0, %v1060
      %v1062 = vrot.slane %v1057, %v1061
      %v1069 = vunpack.c.l.b16 %v1052
      %v1070 = vunpack.c.l.b16 %v1053
      %v1071 = vunpack.c.l.b16 %v1054
      %v1072 = vunpack.c.l.b16 %v1055
      %v1073 = vunpack.c.l.b16 %v1056
      %v1074 = vpack.c.b16 %v1070, %v1069
      %v1075 = vpack.c.b16 %v1072, %v1071
      %v1076 = vpack.c.b16 %v1073, %v1073
      %vm1079 = vcmask 293888
      %v1080 = vsel %vm1079, %v1045, 0
      %v1082 = vsel %vm1079, %v1047, 0
      %v1084 = vsel %vm1079, %v1049, 0
      %v1086 = vsel %vm1079, %v1051, 0
      %vm1088 = vcmask 1041408
      %v1090 = vsel %vm1088, %v1076, 0
      %1092 = vmatprep.subr.bf16.mxu0 0
      %1093 = vmatpush1.bf16.msra.mxu0 %v1074
      %1094 = vmatprep.subr.bf16.mxu0 0
      %1095 = vmatpush1.bf16.msra.mxu0 %v1075
      %1096 = vmatprep.subr.bf16.mxu0 0
      %1097 = vmatpush1.bf16.msra.mxu0 %v1090
      %1098 = vmatprep.subr.bf16.mxu0 0
      %1099 = vmatpush1.bf16.msra.mxu0 0
      %1100 = vmatprep.subr.bf16.mxu0 0
      %1101 = vmatpush1.bf16.msra.mxu0 0
      %1102 = vmatprep.subr.bf16.mxu0 0
      %1103 = vmatpush1.bf16.msra.mxu0 0
      %1104 = vmatprep.subr.bf16.mxu0 0
      %1105 = vmatpush1.bf16.msra.mxu0 0
      %1106 = vmatprep.subr.bf16.mxu0 0
      %1107 = vmatpush1.bf16.msra.mxu0 0
      %1108 = vmatprep.subr.bf16.mxu0 0
      %1109 = vmatpush1.bf16.msra.mxu0 0
      %1110 = vmatprep.subr.bf16.mxu0 0
      %1111 = vmatpush1.bf16.msra.mxu0 0
      %1112 = vmatprep.subr.bf16.mxu0 0
      %1113 = vmatpush1.bf16.msra.mxu0 0
      %1114 = vmatprep.subr.bf16.mxu0 0
      %1115 = vmatpush1.bf16.msra.mxu0 0
      %1116 = vmatprep.subr.bf16.mxu0 0
      %1117 = vmatpush1.bf16.msra.mxu0 0
      %1118 = vmatprep.subr.bf16.mxu0 0
      %1119 = vmatpush1.bf16.msra.mxu0 0
      %1120 = vmatprep.subr.bf16.mxu0 0
      %1121 = vmatpush1.bf16.msra.mxu0 0
      %1122 = vmatprep.subr.bf16.mxu0 0
      %1123 = vmatpush1.bf16.msra.mxu0 0
      %1124 = vmatprep.mubr.bf16.mxu0 0
      %1125 = vmatmul.mubr.bf16.gmra.mrb[0].mxu0 %v1080
      %v1126 = vpop.f32.mrb[0].mxu0
      %v1127 = vadd.f32 %v1062, %v1126
      %v1128 = vpop.f32.mrb[0].mxu0
      %v1129 = vpop.f32.mrb[0].mxu0
      %v1130 = vadd.f32 %v1062, %v1129
      %v1131 = vpop.f32.mrb[0].mxu0
      %1132 = vmatprep.mubr.bf16.mxu0 0
      %1133 = vmatmul.mubr.bf16.gmra.mrb[0].mxu0 %v1082
      %v1134 = vpop.f32.mrb[0].mxu0
      %v1135 = vadd.f32 %v1062, %v1134
      %v1136 = vpop.f32.mrb[0].mxu0
      %v1137 = vpop.f32.mrb[0].mxu0
      %v1138 = vadd.f32 %v1062, %v1137
      %v1139 = vpop.f32.mrb[0].mxu0
      %1140 = vmatprep.mubr.bf16.mxu0 0
      %1141 = vmatmul.mubr.bf16.gmra.mrb[0].mxu0 %v1084
      %v1142 = vpop.f32.mrb[0].mxu0
      %v1143 = vadd.f32 %v1062, %v1142
      %v1144 = vpop.f32.mrb[0].mxu0
      %v1145 = vpop.f32.mrb[0].mxu0
      %v1146 = vadd.f32 %v1062, %v1145
      %v1147 = vpop.f32.mrb[0].mxu0
      %1148 = vmatprep.mubr.bf16.mxu0 0
      %1149 = vmatmul.mubr.bf16.gmra.mrb[0].mxu0 %v1086
      %v1150 = vpop.f32.mrb[0].mxu0
      %v1151 = vadd.f32 %v1062, %v1150
      %v1152 = vpop.f32.mrb[0].mxu0
      %v1153 = vpop.f32.mrb[0].mxu0
      %v1154 = vadd.f32 %v1062, %v1153
      %v1155 = vpop.f32.mrb[0].mxu0
      %1156 = vdwg.mxu0
      %v1157 = vld [vmem:[#allocation2] sm:$0xff]
      %v1158 = vld [vmem:[#allocation2 + $0x8] sm:$0xff]
      %v1159 = vld [vmem:[#allocation2 + $0x10] sm:$0xff]
      %v1160 = vld [vmem:[#allocation2 + $0x18] sm:$0xff]
      %v1161 = vld [vmem:[#allocation2 + $0x20] sm:$0xff]
      %v1162 = vld [vmem:[#allocation2 + $0x28] sm:$0xff]
      %v1163 = vld [vmem:[#allocation2 + $0x30] sm:$0xff]
      %v1164 = vld [vmem:[#allocation2 + $0x38] sm:$0xff]
      %v1165 = vmul.f32 %v1157, 0.5
      %v1166 = vmul.f32 %v1158, 0.5
      %v1167 = vmul.f32 %v1159, 0.5
      %v1168 = vmul.f32 %v1160, 0.5
      %v1169 = vmul.f32 %v1161, 0.5
      %v1170 = vmul.f32 %v1162, 0.5
      %v1171 = vmul.f32 %v1163, 0.5
      %v1172 = vmul.f32 %v1164, 0.5
      %v1173 = vadd.f32 %v1165, %v1127
      %v1174 = vadd.f32 %v1166, %v1130
      %v1175 = vadd.f32 %v1167, %v1135
      %v1176 = vadd.f32 %v1168, %v1138
      %v1177 = vadd.f32 %v1169, %v1143
      %v1178 = vadd.f32 %v1170, %v1146
      %v1179 = vadd.f32 %v1171, %v1151
      %v1180 = vadd.f32 %v1172, %v1154
      %vm1181 = vcmp.gt.f32.partialorder %v1173, 1.0
      %vm1182 = vcmp.gt.f32.partialorder %v1174, 1.0
      %vm1183 = vcmp.gt.f32.partialorder %v1175, 1.0
      %vm1184 = vcmp.gt.f32.partialorder %v1176, 1.0
      %vm1185 = vcmp.gt.f32.partialorder %v1177, 1.0
      %vm1186 = vcmp.gt.f32.partialorder %v1178, 1.0
      %vm1187 = vcmp.gt.f32.partialorder %v1179, 1.0
      %vm1188 = vcmp.gt.f32.partialorder %v1180, 1.0
      %v1189 = vsel %vm1181, 0.0, %v1173
      %v1190 = vsel %vm1182, 0.0, %v1174
      %v1191 = vsel %vm1183, 0.0, %v1175
      %v1192 = vsel %vm1184, 0.0, %v1176
      %v1193 = vsel %vm1185, 0.0, %v1177
      %v1194 = vsel %vm1186, 0.0, %v1178
      %v1195 = vsel %vm1187, 0.0, %v1179
      %v1196 = vsel %vm1188, 0.0, %v1180
      %1197 = vst [vmem:[#allocation2] sm:$0xff] %v1189
      %1198 = vst [vmem:[#allocation2 + $0x8] sm:$0xff] %v1190
      %1199 = vst [vmem:[#allocation2 + $0x10] sm:$0xff] %v1191
      %1200 = vst [vmem:[#allocation2 + $0x18] sm:$0xff] %v1192
      %1201 = vst [vmem:[#allocation2 + $0x20] sm:$0xff] %v1193
      %1202 = vst [vmem:[#allocation2 + $0x28] sm:$0xff] %v1194
      %1203 = vst [vmem:[#allocation2 + $0x30] sm:$0xff] %v1195
      %1204 = vst [vmem:[#allocation2 + $0x38] sm:$0xff] %v1196
      %v1205 = vsel %vm1181, 1, 0
      %v1206 = vsel %vm1182, 1, 0
      %v1207 = vsel %vm1183, 1, 0
      %v1208 = vsel %vm1184, 1, 0
      %v1209 = vsel %vm1185, 1, 0
      %v1210 = vsel %vm1186, 1, 0
      %v1211 = vsel %vm1187, 1, 0
      %v1212 = vsel %vm1188, 1, 0
      %v1213 = vcvt.s32.f32 %v1205
      %v1214 = vcvt.s32.f32 %v1206
      %v1215 = vcvt.s32.f32 %v1207
      %v1216 = vcvt.s32.f32 %v1208
      %v1217 = vcvt.s32.f32 %v1209
      %v1218 = vcvt.s32.f32 %v1210
      %v1219 = vcvt.s32.f32 %v1211
      %v1220 = vcvt.s32.f32 %v1212
      %v1221 = vpack.c.bf16 %v1214, %v1213
      %v1222 = vpack.c.bf16 %v1216, %v1215
      %v1223 = vpack.c.bf16 %v1218, %v1217
      %v1224 = vpack.c.bf16 %v1220, %v1219
      %v1229 = vunpack.c.l.b16 %v1221
      %v1230 = vunpack.c.h.b16 %v1221
      %v1231 = vunpack.c.l.b16 %v1222
      %v1232 = vunpack.c.h.b16 %v1222
      %v1233 = vunpack.c.l.b16 %v1223
      %v1234 = vunpack.c.h.b16 %v1223
      %v1235 = vunpack.c.l.b16 %v1224
      %v1236 = vunpack.c.h.b16 %v1224
      %v1237 = vpack.c.b16 %v1229, %v1229
      %v1238 = vpack.c.b16 %v1230, %v1230
      %v1239 = vpack.c.b16 %v1231, %v1231
      %v1240 = vpack.c.b16 %v1232, %v1232
      %v1241 = vpack.c.b16 %v1233, %v1233
      %v1242 = vpack.c.b16 %v1234, %v1234
      %v1243 = vpack.c.b16 %v1235, %v1235
      %v1244 = vpack.c.b16 %v1236, %v1236
      %1253 = vst [vmem:[%s206] sm:$0xf] %v1237
      %1254 = vst [vmem:[%s206 + $0x4] sm:$0xf] %v1238
      %1255 = vst [vmem:[%s206 + $0x8] sm:$0xf] %v1239
      %1256 = vst [vmem:[%s206 + $0xc] sm:$0xf] %v1240
      %1257 = vst [vmem:[%s206 + $0x10] sm:$0xf] %v1241
      %1258 = vst [vmem:[%s206 + $0x14] sm:$0xf] %v1242
      %1259 = vst [vmem:[%s206 + $0x18] sm:$0xf] %v1243
      %1260 = vst [vmem:[%s206 + $0x1c] sm:$0xf] %v1244
      %p1261 = scmp.lt.s32.totalorder %s18, 1
      %s1262 = scalar_select %p1261, %s18, 1
      %p1263 = scmp.lt.s32.totalorder %s19, 3
      %s1264 = scalar_select %p1263, %s19, 3
      %s1265 = smul.addr %s1264, 8
      %s1266 = smul.addr %s1262, 32
      %s1267 = sadd.s32 %s1265, %s1266
      %s1268 = smul.addr %s1267, 4
      %s1269 = scalar_lea.vmem %s3, %s1268
      // Predicated region
      $region37: #{_forward_impl.1} parent=31 // pred_check
        %p1270 = pneg %p116
      $region38: #{_forward_impl.1} parent=31 // pred_check_branch
        %1272 = sbr.rel (%p1270) target = $region40
      $region39: #{_forward_impl.1} parent=31 // pred_region
        _
      $region40: #{_forward_impl.1} parent=31 // pred_fallthru
        _
    $region32: #{_forward_impl.1} parent=5 // pred_fallthru
      _
    %p1273 = scmp.le.s32.totalorder 2, %s9
    // Predicated region
    $region41: #{_forward_impl.1} parent=5 // pred_check
      %p1274 = pneg %p1273
    $region42: #{_forward_impl.1} parent=5 // pred_check_branch
      %1276 = sbr.rel (%p1274) target = $region44
    $region43: #{_forward_impl.1} parent=5 // pred_region
      %s1277 = ssub.s32 %s9, 2
      // Predicated region
      $region45: #{_forward_impl.1} parent=43 // pred_check
        %p1278 = pneg %p122
      $region46: #{_forward_impl.1} parent=43 // pred_check_branch
        %1280 = sbr.rel (%p1278) target = $region48
      $region47: #{_forward_impl.1} parent=43 // pred_region
        %p1281 = scmp.lt.s32.totalorder %s20, 1
        %s1282 = scalar_select %p1281, %s20, 1
        %p1283 = scmp.lt.s32.totalorder %s21, 3
        %s1284 = scalar_select %p1283, %s21, 3
        %s1285 = smul.addr %s1284, 8
        %s1286 = smul.addr %s1282, 32
        %s1287 = sadd.s32 %s1285, %s1286
        %s1288 = smul.addr %s1287, 4
        %s1289 = scalar_lea.vmem %s3, %s1288
      $region48: #{_forward_impl.1} parent=43 // pred_fallthru
        _
    $region44: #{_forward_impl.1} parent=5 // pred_fallthru
      _
  $region6: #{_forward_impl.1} parent=0 // loop_footer
    %s13 = sadd.s32 1, %s9
  $region7: #{_forward_impl.1} parent=0 // loop_footer_branch
    %8 = sbr.rel target = $region3
  $region8: #{_forward_impl.1} parent=0 // loop_exit
    _

</llo_original>
